<compile_context>
chip_gen: v6e
topology: v6e:2x2x1
jax: 0.10.0
libtpu: 0.0.40
codegen_flags: <defaults>
</compile_context>

<pallas_src>
import functools

import jax
import jax.numpy as jnp
from jax.experimental import pallas as pl
from jax.experimental.pallas import tpu as pltpu


def _dynamic_conv_kernel(x_ref, w_ref, br_ref, o_ref, *,
                         tb, hwp, inv_hw, cout, n_exp):
    # x_ref : (Cin, TB*HWp) bf16      activations, batch folded onto lanes
    # w_ref : (E*Cout + E, Cin) bf16  [expert 1x1 kernels ; routing weight]
    # br_ref: (E, 1) f32              routing bias
    # o_ref : (Cout, TB*HWp)
    x = x_ref[...]

    # One weight-stationary MXU matmul for the whole block (f32 accumulation).
    # The last E rows of w are the routing Linear, so routing logits come out
    # of the same dot: mean_hw(Wr @ x) == Wr @ mean_hw(x).
    y = jnp.dot(w_ref[...], x,
                preferred_element_type=jnp.float32)          # (E*Cout+E, TB*HWp)

    br = br_ref[...]                                         # (E, 1)
    ec = n_exp * cout
    for b in range(tb):                                      # static unroll, TB small
        lo = b * hwp
        y_b = y[:, lo:lo + hwp]                              # (E*Cout+E, HWp)

        # adaptive_avg_pool2d + routing Linear: per-sample lane mean of the
        # routing rows (padded spatial columns are zero, so /real_HW is exact).
        logits = jnp.sum(y_b[ec:ec + n_exp, :], axis=-1,
                         keepdims=True) * inv_hw + br        # (E, 1)
        r = jax.nn.sigmoid(logits)                           # (E, 1) f32

        # Mix expert outputs on the VPU: out_b = sum_e r[e] * y_e.
        out_b = y_b[0:cout, :] * r[0:1, :]
        for e in range(1, n_exp):
            out_b = out_b + y_b[e * cout:(e + 1) * cout, :] * r[e:e + 1, :]

        o_ref[:, lo:lo + hwp] = out_b.astype(o_ref.dtype)


def dynamic_conv(x, routing_w, routing_b, expert_w, *, block_batch=None):
    """DynamicConv forward (1x1 CondConv, stride 1, groups 1, no conv bias).

    x:          (B, Cin, H, W)
    routing_w:  (E, Cin)        nn.Linear(Cin, E).weight
    routing_b:  (E,)            nn.Linear(Cin, E).bias
    expert_w:   (E, Cout, Cin)  CondConv2d expert 1x1 kernels
    returns     (B, Cout, H, W)   (same dtype as x)
    """
    B, Cin, H, W = x.shape
    E, Cout, Cin2 = expert_w.shape
    assert Cin2 == Cin and routing_w.shape == (E, Cin) and routing_b.shape == (E,)

    hw = H * W
    hwp = ((hw + 127) // 128) * 128          # lane-dense spatial length
    out_dtype = x.dtype
    o_bytes = jnp.dtype(out_dtype).itemsize

    # --- samples per grid step (TB): fill a conservative VMEM budget (also
    # fits v7x's 64 MiB VMEM), cap the static unroll, and keep the parallel
    # grid >= 2 steps so both TensorCores get work on megacore parts.
    per_sample = hwp * (2 * Cin * 2                        # bf16 x block, double-buffered
                        + 2 * Cout * o_bytes               # out block, double-buffered
                        + (E * Cout + E + Cout) * 4)       # f32 intermediates
    tb = max(1, (12 * 1024 * 1024) // per_sample)
    tb = min(tb, 16)                                       # bound static unroll
    if B >= 2:
        tb = min(tb, -(-B // 2))
    tb = min(tb, B)
    if block_batch is not None:
        tb = max(1, min(int(block_batch), B))
    n_blocks = -(-B // tb)
    B_pad = n_blocks * tb

    # --- wrapper-side layout plumbing: flatten spatial, zero-pad to lane-dense
    # multiples, fold batch onto the lane axis, cast to bf16 (fused into this
    # same pass) -> (Cin, B_pad*HWp) bf16.
    x_flat = x.reshape(B, Cin, hw)
    if B_pad != B or hwp != hw:
        x_flat = jnp.pad(x_flat, ((0, B_pad - B), (0, 0), (0, hwp - hw)))
    x2d = jnp.transpose(x_flat, (1, 0, 2)).reshape(Cin, B_pad * hwp)
    x2d = x2d.astype(jnp.bfloat16)

    # --- stack [expert kernels ; routing weight] into one bf16 weight so the
    # kernel runs a single weight-stationary matmul per block.
    w_stacked = jnp.concatenate(
        [expert_w.reshape(E * Cout, Cin), routing_w.reshape(E, Cin)],
        axis=0).astype(jnp.bfloat16)                       # (E*Cout+E, Cin)
    br = routing_b.reshape(E, 1).astype(jnp.float32)

    kernel = functools.partial(
        _dynamic_conv_kernel,
        tb=tb, hwp=hwp, inv_hw=1.0 / hw, cout=Cout, n_exp=E)

    out2d = pl.pallas_call(
        kernel,
        out_shape=jax.ShapeDtypeStruct((Cout, B_pad * hwp), out_dtype),
        grid_spec=pltpu.PrefetchScalarGridSpec(
            num_scalar_prefetch=0,
            grid=(n_blocks,),
            in_specs=[
                pl.BlockSpec((Cin, tb * hwp), lambda i: (0, i)),
                # grid-invariant operands: constant block index -> DMA'd once
                pl.BlockSpec((E * Cout + E, Cin), lambda i: (0, 0)),
                pl.BlockSpec((E, 1), lambda i: (0, 0)),
            ],
            out_specs=pl.BlockSpec((Cout, tb * hwp), lambda i: (0, i)),
        ),
        compiler_params=pltpu.CompilerParams(
            dimension_semantics=("parallel",),
            vmem_limit_bytes=32 * 1024 * 1024,
        ),
    )(x2d, w_stacked, br)

    out = out2d.reshape(Cout, B_pad, hwp).transpose(1, 0, 2)[:B, :, :hw]
    return out.reshape(B, Cout, H, W)


if __name__ == "__main__":
    # Module config: in_features=8, out_features=16, kernel_size=1, stride=1,
    # padding='' (-> 0 for k=1), dilation=1, groups=1, bias=False, num_experts=4
    B, Cin, Cout, H, W, E = 2, 8, 16, 16, 16, 4

    key = jax.random.PRNGKey(0)
    kx, kwr, kbr, kew = jax.random.split(key, 4)
    x = jax.random.normal(kx, (B, Cin, H, W), jnp.float32)
    routing_w = jax.random.normal(kwr, (E, Cin), jnp.float32) * 0.1       # Linear weight
    routing_b = jax.random.normal(kbr, (E,), jnp.float32) * 0.1           # Linear bias
    expert_w = jax.random.normal(kew, (E, Cout, Cin), jnp.float32) * 0.1  # CondConv experts

    out = dynamic_conv(x, routing_w, routing_b, expert_w)
    out = jax.block_until_ready(out)

    # Plain-JAX f32 reference of the PyTorch forward.
    pooled = jnp.mean(x, axis=(2, 3))                                     # (B, Cin)
    r = jax.nn.sigmoid(pooled @ routing_w.T + routing_b)                  # (B, E)
    w_b = jnp.einsum('be,eoi->boi', r, expert_w)                          # (B, Cout, Cin)
    ref = jnp.einsum('boi,bihw->bohw', w_b, x)                            # (B, Cout, H, W)

    assert out.shape == (B, Cout, H, W)
    max_err = float(jnp.max(jnp.abs(out - ref)))
    assert jnp.allclose(out, ref, atol=2e-2, rtol=2e-2), \
        f"mismatch vs reference (max abs err {max_err})"

    print("KERNEL_OK")
</pallas_src>

<mosaic_0001>
module attributes {stable_mosaic.version = 11 : i64} {
  func.func @_dynamic_conv_kernel(%arg0: i32, %arg1: memref<8x256xbf16, #tpu.memory_space<vmem>>, %arg2: memref<68x8xbf16, #tpu.memory_space<vmem>>, %arg3: memref<4x1xf32, #tpu.memory_space<vmem>>, %arg4: memref<16x256xf32, #tpu.memory_space<vmem>>) attributes {dimension_semantics = [#tpu.dimension_semantics<parallel>], iteration_bounds = array<i64: 2>, scalar_prefetch = 0 : i64, scratch_operands = 0 : i64, tpu.core_type = #tpu.core_type<tc>, window_params = [{transform_indices = @transform_0, window_bounds = array<i64: 8, 256>}, {pipeline_mode = #tpu.pipeline_mode<synchronous>, transform_indices = @transform_1, window_bounds = array<i64: 68, 8>}, {pipeline_mode = #tpu.pipeline_mode<synchronous>, transform_indices = @transform_2, window_bounds = array<i64: 4, 1>}, {transform_indices = @transform_3, window_bounds = array<i64: 16, 256>}]} {
    %c0 = arith.constant 0 : index
    %c0_0 = arith.constant 0 : index
    %0 = vector.load %arg1[%c0, %c0_0] : memref<8x256xbf16, #tpu.memory_space<vmem>>, vector<8x256xbf16>
    %c0_1 = arith.constant 0 : index
    %c0_2 = arith.constant 0 : index
    %1 = vector.load %arg2[%c0_1, %c0_2] : memref<68x8xbf16, #tpu.memory_space<vmem>>, vector<68x8xbf16>
    %cst = arith.constant dense<0.000000e+00> : vector<68x256xf32>
    %2 = tpu.matmul %1, %0, %cst {dimension_numbers = #tpu.dot_dimension_numbers<[1], [0], [0], [1], [0, 0, 1, 1], [], []>} : vector<68x8xbf16>, vector<8x256xbf16>, vector<68x256xf32> -> vector<68x256xf32>
    %c0_3 = arith.constant 0 : index
    %c0_4 = arith.constant 0 : index
    %3 = vector.load %arg3[%c0_3, %c0_4] : memref<4x1xf32, #tpu.memory_space<vmem>>, vector<4x1xf32>
    %4 = vector.extract_strided_slice %2 {offsets = [64, 0], sizes = [4, 256], strides = [1, 1]} : vector<68x256xf32> to vector<4x256xf32>
    %cst_5 = arith.constant dense<0.000000e+00> : vector<4xf32>
    %5 = vector.multi_reduction <add>, %4, %cst_5 [1] : vector<4x256xf32> to vector<4xf32>
    %6 = vector.shape_cast %5 : vector<4xf32> to vector<4x1xf32>
    %cst_6 = arith.constant 3.906250e-03 : f32
    %7 = vector.broadcast %cst_6 : f32 to vector<4x1xf32>
    %8 = arith.mulf %6, %7 : vector<4x1xf32>
    %9 = arith.addf %8, %3 : vector<4x1xf32>
    %10 = arith.negf %9 : vector<4x1xf32>
    %11 = math.exp %10 : vector<4x1xf32>
    %cst_7 = arith.constant 1.000000e+00 : f32
    %12 = vector.broadcast %cst_7 : f32 to vector<4x1xf32>
    %13 = arith.addf %12, %11 : vector<4x1xf32>
    %14 = arith.divf %12, %13 : vector<4x1xf32>
    %15 = vector.extract_strided_slice %2 {offsets = [0, 0], sizes = [16, 256], strides = [1, 1]} : vector<68x256xf32> to vector<16x256xf32>
    %16 = vector.extract_strided_slice %14 {offsets = [0, 0], sizes = [1, 1], strides = [1, 1]} : vector<4x1xf32> to vector<1x1xf32>
    %17 = vector.broadcast %16 : vector<1x1xf32> to vector<16x256xf32>
    %18 = arith.mulf %15, %17 : vector<16x256xf32>
    %19 = vector.extract_strided_slice %2 {offsets = [16, 0], sizes = [16, 256], strides = [1, 1]} : vector<68x256xf32> to vector<16x256xf32>
    %20 = vector.extract_strided_slice %14 {offsets = [1, 0], sizes = [1, 1], strides = [1, 1]} : vector<4x1xf32> to vector<1x1xf32>
    %21 = vector.broadcast %20 : vector<1x1xf32> to vector<16x256xf32>
    %22 = arith.mulf %19, %21 : vector<16x256xf32>
    %23 = arith.addf %18, %22 : vector<16x256xf32>
    %24 = vector.extract_strided_slice %2 {offsets = [32, 0], sizes = [16, 256], strides = [1, 1]} : vector<68x256xf32> to vector<16x256xf32>
    %25 = vector.extract_strided_slice %14 {offsets = [2, 0], sizes = [1, 1], strides = [1, 1]} : vector<4x1xf32> to vector<1x1xf32>
    %26 = vector.broadcast %25 : vector<1x1xf32> to vector<16x256xf32>
    %27 = arith.mulf %24, %26 : vector<16x256xf32>
    %28 = arith.addf %23, %27 : vector<16x256xf32>
    %29 = vector.extract_strided_slice %2 {offsets = [48, 0], sizes = [16, 256], strides = [1, 1]} : vector<68x256xf32> to vector<16x256xf32>
    %30 = vector.extract_strided_slice %14 {offsets = [3, 0], sizes = [1, 1], strides = [1, 1]} : vector<4x1xf32> to vector<1x1xf32>
    %31 = vector.broadcast %30 : vector<1x1xf32> to vector<16x256xf32>
    %32 = arith.mulf %29, %31 : vector<16x256xf32>
    %33 = arith.addf %28, %32 : vector<16x256xf32>
    %c0_8 = arith.constant 0 : index
    %c0_9 = arith.constant 0 : index
    %34 = vector.load %arg4[%c0_8, %c0_9] : memref<16x256xf32, #tpu.memory_space<vmem>>, vector<16x256xf32>
    tpu.vector_store %arg4[%c0_8, %c0_9], %33 {strides = array<i32>} : memref<16x256xf32, #tpu.memory_space<vmem>>, vector<16x256xf32>,
    return
  }
  func.func @transform_0(%arg0: i32) -> (i32, i32) {
    %c0_i32 = arith.constant 0 : i32
    %c0_i32_0 = arith.constant 0 : i32
    return %c0_i32, %arg0 : i32, i32
  }
  func.func @transform_1(%arg0: i32) -> (i32, i32) {
    %c0_i32 = arith.constant 0 : i32
    %c0_i32_0 = arith.constant 0 : i32
    %c0_i32_1 = arith.constant 0 : i32
    return %c0_i32, %c0_i32_0 : i32, i32
  }
  func.func @transform_2(%arg0: i32) -> (i32, i32) {
    %c0_i32 = arith.constant 0 : i32
    %c0_i32_0 = arith.constant 0 : i32
    %c0_i32_1 = arith.constant 0 : i32
    return %c0_i32, %c0_i32_0 : i32, i32
  }
  func.func @transform_3(%arg0: i32) -> (i32, i32) {
    %c0_i32 = arith.constant 0 : i32
    %c0_i32_0 = arith.constant 0 : i32
    return %c0_i32, %arg0 : i32, i32
  }
}

</mosaic_0001>

<llo_original>
// kernel: tpu_custom_call.1
$region0: #{tpu_custom_call.1}
  #allocation0 [shape = 'u32[]', space=smem, size = 0x4, offset = 0x4, fixed_abs, tag = 'smem constant byte address 0x4 - core index']
  #allocation1 [shape = 'u32[144,128]{1,0:T(1,128)}', space=vmem, size = 0x12000, scoped, tag = 'internal scratch']
  %s0 = inlined_call_operand.vmem [shape: bf16[8,512], index: 0, kind: input, shape index: {}]
  %s1 = inlined_call_operand.vmem [shape: bf16[68,8], index: 1, kind: input, shape index: {}]
  %s2 = inlined_call_operand.vmem [shape: f32[4,1], index: 2, kind: input, shape index: {}]
  %s3 = inlined_call_operand.hbm [shape: f32[16,512], index: 3, kind: output, shape index: {}]
  %s4 = sld [smem:[#allocation0]]
  $region45: #{tpu_custom_call.1} parent=0
    _
  %s6 = ssub.s32 1, %s4
  %s7 = scalar_select 0, %s6, %s4
  $region1: #{tpu_custom_call.1} parent=0
    #allocation2 [shape = 'u8[32768]{0}', space=vmem, size = 0x8000, scoped, tag = 'output window, operand 0']
    #allocation3 [shape = 's32[2]{0}', space=sflag, size = 0x8, scoped, tag = 'scoped memory for tpu_custom_call.1']
    %8 = vsyncpa [#allocation3], 0
    %s9 = scalar_lea.sflag [#allocation3], 1
    %10 = vsyncpa %s9, 0
    loop: start=0, step=1, limit=4
    $region2: #{tpu_custom_call.1} parent=1 // loop_pre_header
      _
    $region3: #{tpu_custom_call.1} parent=1 // loop_header
      %s12 = sphi 0, %s16
      %p13 = scmp.ge.s32.totalorder %s12, 4
      %s22 = sphi 0, %s24
      %s25 = sphi 0, %s22
      %s26 = sphi 0, %s25
      %s42 = sphi 0, %s26
      %s46 = sphi 0, %s46
      %s48 = sphi 0, %s46
      %s49 = sphi 0, %s48
      %s63 = sphi 0, %s49
      %s67 = sphi 0, %s67
      %s69 = sphi 0, %s67
      %s70 = sphi 0, %s69
      %s84 = sphi 0, %s70
      %s90 = sphi 0, %s92
      %s93 = sphi 0, %s90
      %s94 = sphi 0, %s93
      %s110 = sphi 0, %s94
    $region4: #{tpu_custom_call.1} parent=1 // loop_header_branch
      %15 = sbr.rel (%p13) target = $region8
    $region5: #{tpu_custom_call.1} parent=1 // loop_body
      %s17 = ssub.s32 %s12, 1
      %s18 = ssub.s32 %s12, 2
      %s19 = sadd.s32 %s12, 1
      %s20 = ssub.s32 %s12, %s19
      %p21 = scmp.eq.s32.totalorder %s20, 0
      %s23 = sadd.s32 %s22, 1
      %s24 = scalar_select %p21, %s22, %s23
      %p27 = pneg %p21
      %p28 = scmp.eq.s32.totalorder %s12, 1
      %p29 = por %p27, %p28
      %p30 = scmp.ne.s32.totalorder %s22, %s25
      %p31 = scmp.eq.s32.totalorder %s12, 0
      %p32 = por %p30, %p31
      %p33 = scmp.ne.s32.totalorder %s22, %s25
      %p34 = scmp.eq.s32.totalorder %s17, 1
      %p35 = por %p33, %p34
      %p36 = scmp.ne.s32.totalorder %s25, %s26
      %p37 = scmp.eq.s32.totalorder %s17, 0
      %p38 = por %p36, %p37
      %p39 = scmp.ne.s32.totalorder %s25, %s26
      %p40 = scmp.eq.s32.totalorder %s18, 1
      %p41 = por %p39, %p40
      %p43 = scmp.ne.s32.totalorder %s26, %s42
      %p44 = scmp.eq.s32.totalorder %s18, 0
      %p45 = por %p43, %p44
      %s47 = sadd.s32 %s46, 1
      %p50 = scmp.eq.s32.totalorder %s12, 1
      %p51 = scmp.ne.s32.totalorder %s46, %s48
      %p52 = scmp.eq.s32.totalorder %s12, 0
      %p53 = por %p51, %p52
      %p54 = scmp.ne.s32.totalorder %s46, %s48
      %p55 = scmp.eq.s32.totalorder %s17, 1
      %p56 = por %p54, %p55
      %p57 = scmp.ne.s32.totalorder %s48, %s49
      %p58 = scmp.eq.s32.totalorder %s17, 0
      %p59 = por %p57, %p58
      %p60 = scmp.ne.s32.totalorder %s48, %s49
      %p61 = scmp.eq.s32.totalorder %s18, 1
      %p62 = por %p60, %p61
      %p64 = scmp.ne.s32.totalorder %s49, %s63
      %p65 = scmp.eq.s32.totalorder %s18, 0
      %p66 = por %p64, %p65
      %s68 = sadd.s32 %s67, 1
      %p71 = scmp.eq.s32.totalorder %s12, 1
      %p72 = scmp.ne.s32.totalorder %s67, %s69
      %p73 = scmp.eq.s32.totalorder %s12, 0
      %p74 = por %p72, %p73
      %p75 = scmp.ne.s32.totalorder %s67, %s69
      %p76 = scmp.eq.s32.totalorder %s17, 1
      %p77 = por %p75, %p76
      %p78 = scmp.ne.s32.totalorder %s69, %s70
      %p79 = scmp.eq.s32.totalorder %s17, 0
      %p80 = por %p78, %p79
      %p81 = scmp.ne.s32.totalorder %s69, %s70
      %p82 = scmp.eq.s32.totalorder %s18, 1
      %p83 = por %p81, %p82
      %p85 = scmp.ne.s32.totalorder %s70, %s84
      %p86 = scmp.eq.s32.totalorder %s18, 0
      %p87 = por %p85, %p86
      %s88 = ssub.s32 %s12, %s19
      %p89 = scmp.eq.s32.totalorder %s88, 0
      %s91 = sadd.s32 %s90, 1
      %s92 = scalar_select %p89, %s90, %s91
      %p95 = pneg %p89
      %p96 = scmp.eq.s32.totalorder %s12, 1
      %p97 = por %p95, %p96
      %p98 = scmp.ne.s32.totalorder %s90, %s93
      %p99 = scmp.eq.s32.totalorder %s12, 0
      %p100 = por %p98, %p99
      %p101 = scmp.ne.s32.totalorder %s90, %s93
      %p102 = scmp.eq.s32.totalorder %s17, 1
      %p103 = por %p101, %p102
      %p104 = scmp.ne.s32.totalorder %s93, %s94
      %p105 = scmp.eq.s32.totalorder %s17, 0
      %p106 = por %p104, %p105
      %p107 = scmp.ne.s32.totalorder %s93, %s94
      %p108 = scmp.eq.s32.totalorder %s18, 1
      %p109 = por %p107, %p108
      %p111 = scmp.ne.s32.totalorder %s94, %s110
      %p112 = scmp.eq.s32.totalorder %s18, 0
      %p113 = por %p111, %p112
      %p114 = scmp.le.s32.totalorder 1, %s12
      %p115 = scmp.lt.s32.totalorder %s12, 3
      %p116 = pnand %p114, %p115
      %p117 = pneg %p116
      // Predicated region
      $region9: #{tpu_custom_call.1} parent=5 // pred_check
        _
      $region10: #{tpu_custom_call.1} parent=5 // pred_check_branch
        %119 = sbr.rel (%p116) target = $region12
      $region11: #{tpu_custom_call.1} parent=5 // pred_region
        %s120 = ssub.s32 %s12, 1
        // Predicated region
        $region13: #{tpu_custom_call.1} parent=11 // pred_check
          %p121 = pneg %p59
        $region14: #{tpu_custom_call.1} parent=11 // pred_check_branch
          %123 = sbr.rel (%p121) target = $region16
        $region15: #{tpu_custom_call.1} parent=11 // pred_region
          _
        $region16: #{tpu_custom_call.1} parent=11 // pred_fallthru
          _
        // Predicated region
        $region17: #{tpu_custom_call.1} parent=11 // pred_check
          %p124 = pneg %p80
        $region18: #{tpu_custom_call.1} parent=11 // pred_check_branch
          %126 = sbr.rel (%p124) target = $region20
        $region19: #{tpu_custom_call.1} parent=11 // pred_region
          _
        $region20: #{tpu_custom_call.1} parent=11 // pred_fallthru
          _
      $region12: #{tpu_custom_call.1} parent=5 // pred_fallthru
        _
      %p127 = scmp.lt.s32.totalorder %s12, 2
      // Predicated region
      $region21: #{tpu_custom_call.1} parent=5 // pred_check
        %p128 = pneg %p127
      $region22: #{tpu_custom_call.1} parent=5 // pred_check_branch
        %130 = sbr.rel (%p128) target = $region24
      $region23: #{tpu_custom_call.1} parent=5 // pred_region
        // Predicated region
        $region25: #{tpu_custom_call.1} parent=23 // pred_check
          %p131 = pneg %p32
        $region26: #{tpu_custom_call.1} parent=23 // pred_check_branch
          %133 = sbr.rel (%p131) target = $region28
        $region27: #{tpu_custom_call.1} parent=23 // pred_region
          %s134 = smul.u32 2, %s12
          %p135 = scmp.lt.s32.totalorder %s134, 3
          %s136 = scalar_select %p135, %s134, 3
          %s137 = smul.addr %s136, 4
          %s138 = scalar_lea.vmem %s0, %s137
          %s139 = smul.u32 2, %s12
        $region28: #{tpu_custom_call.1} parent=23 // pred_fallthru
          _
      $region24: #{tpu_custom_call.1} parent=5 // pred_fallthru
        _
      %p140 = scmp.le.s32.totalorder 1, %s12
      %p141 = scmp.lt.s32.totalorder %s12, 3
      %p142 = pnand %p140, %p141
      %p143 = pneg %p142
      // Predicated region
      $region29: #{tpu_custom_call.1} parent=5 // pred_check
        _
      $region30: #{tpu_custom_call.1} parent=5 // pred_check_branch
        %145 = sbr.rel (%p142) target = $region32
      $region31: #{tpu_custom_call.1} parent=5 // pred_region
        %s146 = ssub.s32 %s12, 1
        %s147 = smul.u32 2, %s17
        %p148 = scmp.lt.s32.totalorder %s147, 3
        %s149 = scalar_select %p148, %s147, 3
        %s150 = smul.addr %s149, 4
        %s151 = scalar_lea.vmem %s0, %s150
        %p152 = pneg %p38
        %p153 = pneg %p35
        %p154 = pneg %p59
        %p155 = pneg %p56
        %p156 = pneg %p80
        %p157 = pneg %p77
        %p158 = pneg %p106
        %p159 = pneg %p103
        %s160 = sand.u32 %s93, 1
        %s161 = scalar_lea.sflag [#allocation3], %s160
        %s162 = sand.u32 %s93, 1
        %s163 = smul.addr %s162, 32
        %s164 = scalar_lea.vmem [#allocation2], %s163
        %s165 = smul.u32 2, %s17
        %p166 = scmp.lt.s32.totalorder %s165, 3
        %s167 = scalar_select %p166, %s165, 3
        %s168 = smul.addr %s167, 4
        %s169 = scalar_lea.vmem %s0, %s168
        %s170 = smul.u32 2, %s17
        %s171 = smul.u32 2, %s17
        %v173 = vld [vmem:[%s169] sm:$0xff]
        %v174 = vld [vmem:[%s1] sm:$0xf]
        %v175 = vld [vmem:[%s1 + $0x4] sm:$0xf]
        %v176 = vld [vmem:[%s1 + $0x8] sm:$0xf]
        %v177 = vld [vmem:[%s1 + $0xc] sm:$0xf]
        %v178 = vld [vmem:[%s1 + $0x10] sm:$0xf]
        %v179 = vld [vmem:[%s1 + $0x14] sm:$0xf]
        %v180 = vld [vmem:[%s1 + $0x18] sm:$0xf]
        %v181 = vld [vmem:[%s1 + $0x1c] sm:$0xf]
        %v182 = vld [vmem:[%s1 + $0x20] sm:$0x3]
        %v192 = vunpack.c.l.b16 %v174
        %v193 = vunpack.c.l.b16 %v175
        %v194 = vunpack.c.l.b16 %v176
        %v195 = vunpack.c.l.b16 %v177
        %v196 = vunpack.c.l.b16 %v178
        %v197 = vunpack.c.l.b16 %v179
        %v198 = vunpack.c.l.b16 %v180
        %v199 = vunpack.c.l.b16 %v181
        %v200 = vunpack.c.l.b16 %v182
        %v201 = vpack.c.b16 %v193, %v192
        %v202 = vpack.c.b16 %v195, %v194
        %v203 = vpack.c.b16 %v197, %v196
        %v204 = vpack.c.b16 %v199, %v198
        %v205 = vpack.c.b16 %v200, %v200
        %v207 = vunpack.c.l.b16 %v173
        %v208 = vunpack.c.h.b16 %v173
        %v209 = vpack.c.b16 %v207, %v207
        %v210 = vpack.c.b16 %v208, %v208
        %vm211 = vcmask 64512
        %v213 = vsel %vm211, %v201, 0
        %v216 = vsel %vm211, %v202, 0
        %v219 = vsel %vm211, %v203, 0
        %v222 = vsel %vm211, %v204, 0
        %v225 = vsel %vm211, %v205, 0
        %vm227 = vcmask 1043456
        %v229 = vsel %vm227, %v209, 0
        %v232 = vsel %vm227, %v210, 0
        %234 = vmatprep.subr.bf16.mxu0 0
        %235 = vmatpush1.bf16.msra.mxu0 0
        %236 = vmatprep.subr.bf16.mxu0 0
        %237 = vmatpush1.bf16.msra.mxu0 0
        %238 = vmatprep.subr.bf16.mxu0 0
        %239 = vmatpush1.bf16.msra.mxu0 0
        %240 = vmatprep.subr.bf16.mxu0 0
        %241 = vmatpush1.bf16.msra.mxu0 0
        %242 = vmatprep.subr.bf16.mxu0 0
        %243 = vmatpush1.bf16.msra.mxu0 0
        %244 = vmatprep.subr.bf16.mxu0 0
        %245 = vmatpush1.bf16.msra.mxu0 0
        %246 = vmatprep.subr.bf16.mxu0 0
        %247 = vmatpush1.bf16.msra.mxu0 0
        %248 = vmatprep.subr.bf16.mxu0 %v232
        %249 = vmatpush1.bf16.msra.mxu0 %v229
        %250 = vmatprep.subr.bf16.mxu0 0
        %251 = vmatpush2.bf16.msra.mxu0 0
        %252 = vmatprep.subr.bf16.mxu0 0
        %253 = vmatpush2.bf16.msra.mxu0 0
        %254 = vmatprep.subr.bf16.mxu0 0
        %255 = vmatpush2.bf16.msra.mxu0 0
        %256 = vmatprep.subr.bf16.mxu0 0
        %257 = vmatpush2.bf16.msra.mxu0 0
        %258 = vmatprep.subr.bf16.mxu0 0
        %259 = vmatpush2.bf16.msra.mxu0 0
        %260 = vmatprep.subr.bf16.mxu0 0
        %261 = vmatpush2.bf16.msra.mxu0 0
        %262 = vmatprep.subr.bf16.mxu0 0
        %263 = vmatpush2.bf16.msra.mxu0 0
        %264 = vmatprep.subr.bf16.mxu0 0
        %265 = vmatpush2.bf16.msra.mxu0 0
        %266 = vmatprep.mubr.bf16.mxu0 0
        %267 = vmatmul.mubr.bf16.gmra.mxu0 %v213
        %v268 = vpop.f32.mrf.mxu0
        %v269 = vadd.f32 0.0, %v268
        %v270 = vpop.f32.mrf.mxu0
        %v271 = vadd.f32 0.0, %v270
        %v272 = vpop.f32.mrf.mxu0
        %v273 = vadd.f32 0.0, %v272
        %v274 = vpop.f32.mrf.mxu0
        %v275 = vadd.f32 0.0, %v274
        %276 = vmatprep.mubr.bf16.mxu0 0
        %277 = vmatmul.mubr.bf16.gmra.mxu0 %v216
        %v278 = vpop.f32.mrf.mxu0
        %v279 = vadd.f32 0.0, %v278
        %v280 = vpop.f32.mrf.mxu0
        %v281 = vadd.f32 0.0, %v280
        %v282 = vpop.f32.mrf.mxu0
        %v283 = vadd.f32 0.0, %v282
        %v284 = vpop.f32.mrf.mxu0
        %v285 = vadd.f32 0.0, %v284
        %286 = vmatprep.mubr.bf16.mxu0 0
        %287 = vmatmul.mubr.bf16.gmra.mxu0 %v219
        %v288 = vpop.f32.mrf.mxu0
        %v289 = vadd.f32 0.0, %v288
        %v290 = vpop.f32.mrf.mxu0
        %v291 = vadd.f32 0.0, %v290
        %v292 = vpop.f32.mrf.mxu0
        %v293 = vadd.f32 0.0, %v292
        %v294 = vpop.f32.mrf.mxu0
        %v295 = vadd.f32 0.0, %v294
        %296 = vmatprep.mubr.bf16.mxu0 0
        %297 = vmatmul.mubr.bf16.gmra.mxu0 %v222
        %v298 = vpop.f32.mrf.mxu0
        %v299 = vadd.f32 0.0, %v298
        %v300 = vpop.f32.mrf.mxu0
        %v301 = vadd.f32 0.0, %v300
        %v302 = vpop.f32.mrf.mxu0
        %v303 = vadd.f32 0.0, %v302
        %v304 = vpop.f32.mrf.mxu0
        %v305 = vadd.f32 0.0, %v304
        %306 = vmatprep.mubr.bf16.mxu0 0
        %307 = vmatmul.mubr.bf16.gmra.mxu0 %v225
        %v308 = vpop.f32.mrf.mxu0
        %v309 = vadd.f32 0.0, %v308
        %v310 = vpop.f32.mrf.mxu0
        %v311 = vadd.f32 0.0, %v310
        %v312 = vpop.f32.mrf.mxu0
        %v313 = vpop.f32.mrf.mxu0
        %314 = vdwg.mxu0
        %v315 = vld [vmem:[%s2] sm:$0xf]
        %v316 = vsel %vm227, %v309, 0.0
        %v317 = vsel %vm227, %v311, 0.0
        %v318 = vadd.f32 %v316, %v317
        %319 = vadd.xlane.f32.xlu0 %v318
        %v320 = vpop.xlane.xlu0 %319
        %v321 = vmul.f32 %v320, 0.00390625
        %v322 = vadd.f32 %v321, %v315
        %v323 = vxor.u32 %v322, 2147483648
        %v324 = vmul.f32 %v323, 1.442695
        %v325 = vpow.pop %v324
        %v326 = vadd.f32 %v325, 1.0
        %v327 = vrcp.pop %v326
        %v328 = vmul.f32 1.0, %v327
        %s330 = vtos %v328
        %v331 = vstv %s330
        %v333 = vmul.f32 %v269, %v331
        %v334 = vmul.f32 %v271, %v331
        %v335 = vmul.f32 %v273, %v331
        %v336 = vmul.f32 %v275, %v331
        %v337 = vrot.slane %v328, 1
        %s338 = vtos %v337
        %v339 = vstv %s338
        %v341 = vmul.f32 %v279, %v339
        %v342 = vmul.f32 %v281, %v339
        %v343 = vmul.f32 %v283, %v339
        %v344 = vmul.f32 %v285, %v339
        %v345 = vadd.f32 %v333, %v341
        %v346 = vadd.f32 %v334, %v342
        %v347 = vadd.f32 %v335, %v343
        %v348 = vadd.f32 %v336, %v344
        %v349 = vrot.slane %v328, 2
        %s350 = vtos %v349
        %v351 = vstv %s350
        %v353 = vmul.f32 %v289, %v351
        %v354 = vmul.f32 %v291, %v351
        %v355 = vmul.f32 %v293, %v351
        %v356 = vmul.f32 %v295, %v351
        %v357 = vadd.f32 %v345, %v353
        %v358 = vadd.f32 %v346, %v354
        %v359 = vadd.f32 %v347, %v355
        %v360 = vadd.f32 %v348, %v356
        %v361 = vrot.slane %v328, 3
        %s362 = vtos %v361
        %v363 = vstv %s362
        %v365 = vmul.f32 %v299, %v363
        %v366 = vmul.f32 %v301, %v363
        %v367 = vmul.f32 %v303, %v363
        %v368 = vmul.f32 %v305, %v363
        %v369 = vadd.f32 %v357, %v365
        %v370 = vadd.f32 %v358, %v366
        %v371 = vadd.f32 %v359, %v367
        %v372 = vadd.f32 %v360, %v368
        %373 = vst [vmem:[%s164] sm:$0xff] %v369
        %374 = vst [vmem:[%s164 + $0x8] sm:$0xff] %v370
        %375 = vst [vmem:[%s164 + $0x10] sm:$0xff] %v371
        %376 = vst [vmem:[%s164 + $0x18] sm:$0xff] %v372
        %s377 = sand.u32 %s93, 1
        %s378 = scalar_lea.sflag [#allocation3], %s377
        %s379 = sand.u32 %s93, 1
        %s380 = smul.addr %s379, 32
        %s381 = scalar_lea.vmem [#allocation2], %s380
        // Predicated region
        $region33: #{tpu_custom_call.1} parent=31 // pred_check
          %p382 = pneg %p103
        $region34: #{tpu_custom_call.1} parent=31 // pred_check_branch
          %384 = sbr.rel (%p382) target = $region36
        $region35: #{tpu_custom_call.1} parent=31 // pred_region
          %s385 = smul.u32 2, %s17
          %s387 = ssub.s32 512, 512
          %388 = vsyncadd %s378, %s387
          %s389 = smul.addr %s385, 128
          %s390 = scalar_lea.hbm %s3, %s389
          %s391 = sshll.u32 %s381, 4
          %s392 = int_to_ptr.vmem [resolvable:$true] %s391
          %397 = dma.vmem_to_hbm [thread:$0]  %s392, 512, %s390, %s378, 256, 512, 16
        $region36: #{tpu_custom_call.1} parent=31 // pred_fallthru
          _
      $region32: #{tpu_custom_call.1} parent=5 // pred_fallthru
        _
      %p398 = scmp.le.s32.totalorder 2, %s12
      // Predicated region
      $region37: #{tpu_custom_call.1} parent=5 // pred_check
        %p399 = pneg %p398
      $region38: #{tpu_custom_call.1} parent=5 // pred_check_branch
        %401 = sbr.rel (%p399) target = $region40
      $region39: #{tpu_custom_call.1} parent=5 // pred_region
        %s402 = ssub.s32 %s12, 2
        // Predicated region
        $region41: #{tpu_custom_call.1} parent=39 // pred_check
          %p403 = pneg %p109
        $region42: #{tpu_custom_call.1} parent=39 // pred_check_branch
          %405 = sbr.rel (%p403) target = $region44
        $region43: #{tpu_custom_call.1} parent=39 // pred_region
          %s406 = sand.u32 %s94, 1
          %s407 = scalar_lea.sflag [#allocation3], %s406
          %s408 = sand.u32 %s94, 1
          %s409 = smul.addr %s408, 32
          %s410 = scalar_lea.vmem [#allocation2], %s409
          %411 = dma.done %s407, 512
        $region44: #{tpu_custom_call.1} parent=39 // pred_fallthru
          _
      $region40: #{tpu_custom_call.1} parent=5 // pred_fallthru
        _
    $region6: #{tpu_custom_call.1} parent=1 // loop_footer
      %s16 = sadd.s32 1, %s12
    $region7: #{tpu_custom_call.1} parent=1 // loop_footer_branch
      %11 = sbr.rel target = $region3
    $region8: #{tpu_custom_call.1} parent=1 // loop_exit
      _
    %412 = vsyncpa [#allocation3], 1
    %s413 = scalar_lea.sflag [#allocation3], 1
    %414 = vsyncpa %s413, 1

</llo_original>
